<compile_context>
chip_gen: v6e
topology: v6e:2x2x1
jax: 0.10.0
libtpu: 0.0.40
codegen_flags: <defaults>
</compile_context>

<pallas_src>
import functools

import jax
import jax.numpy as jnp
from jax import lax
from jax.experimental import pallas as pl
from jax.experimental.pallas import tpu as pltpu

_WIDTH = 1024          # lane-dense last dim (8 * 128) -> unmasked bulk stores
_MAX_BLOCK_ROWS = 512  # block = (512, 1024) f32 = 2 MiB; in+out dbl-buffered = 8 MiB
_ROW_ALIGN = 32        # keeps the sublane dim tile-friendly for f32/bf16/int8


def _dropout_kernel(seed_ref, x_ref, o_ref, *, threshold, scale, block_elems):
    """Elementwise dropout on one (block_rows, width) tile.

    Randomness: stateless hash of (global element index, seed) using the
    lowbias32 integer mixer -> uniform uint32; keep iff bits >= threshold,
    where threshold = round(p * 2^32) (exact integer compare, no f32 convert).
    """
    shape = x_ref.shape
    pid = pl.program_id(0)

    # Global flat element index for every element of this tile (uint32, wraps).
    row = lax.broadcasted_iota(jnp.int32, shape, 0).astype(jnp.uint32)
    col = lax.broadcasted_iota(jnp.int32, shape, 1).astype(jnp.uint32)
    base = pid.astype(jnp.uint32) * jnp.uint32(block_elems)
    idx = base + row * jnp.uint32(shape[1]) + col

    # Mix in the seed with a large odd multiplier so nearby seeds give
    # unrelated streams, then apply the lowbias32 finalizer.
    seed_u = seed_ref[0].astype(jnp.uint32)
    h = idx ^ (seed_u * jnp.uint32(0x9E3779B9))
    h = h ^ (h >> 16)
    h = h * jnp.uint32(0x7FEB352D)
    h = h ^ (h >> 15)
    h = h * jnp.uint32(0x846CA68B)
    h = h ^ (h >> 16)

    keep = h >= jnp.uint32(threshold)

    # Do the select/scale in f32 (avoids bf16 VPU pack/unpack on v5e),
    # cast once on the store.
    xf = x_ref[...].astype(jnp.float32)
    y = jnp.where(keep, xf * jnp.float32(scale), jnp.float32(0.0))
    o_ref[...] = y.astype(o_ref.dtype)


def default_dropout(x, *, p=0.0, training=False, seed=0):
    """JAX/Pallas equivalent of DefaultDropout.forward (any shape/layout)."""
    # Identity path: no kernel, no copies.
    if (not training) or p == 0.0:
        return x
    if p >= 1.0:
        return jnp.zeros_like(x)

    orig_shape = x.shape
    orig_dtype = x.dtype
    n = x.size

    # Lane-dense 2D slab (rows_padded, _WIDTH), padded only if needed.
    rows = pl.cdiv(n, _WIDTH)
    block_rows = min(_MAX_BLOCK_ROWS, pl.cdiv(rows, _ROW_ALIGN) * _ROW_ALIGN)
    rows_padded = pl.cdiv(rows, block_rows) * block_rows
    padded_n = rows_padded * _WIDTH

    flat = jnp.ravel(x)
    if padded_n != n:
        flat = jnp.pad(flat, (0, padded_n - n))
    slab = flat.reshape(rows_padded, _WIDTH)

    grid = (rows_padded // block_rows,)
    block_elems = block_rows * _WIDTH
    threshold = min(int(round(float(p) * 2.0 ** 32)), 2 ** 32 - 1)
    scale = 1.0 / (1.0 - float(p))
    seed_arr = jnp.asarray([seed], dtype=jnp.int32)

    out_slab = pl.pallas_call(
        functools.partial(
            _dropout_kernel,
            threshold=threshold,
            scale=scale,
            block_elems=block_elems,
        ),
        out_shape=jax.ShapeDtypeStruct(slab.shape, orig_dtype),
        grid_spec=pltpu.PrefetchScalarGridSpec(
            num_scalar_prefetch=1,
            grid=grid,
            in_specs=[pl.BlockSpec((block_rows, _WIDTH), lambda i, s: (i, 0))],
            out_specs=pl.BlockSpec((block_rows, _WIDTH), lambda i, s: (i, 0)),
        ),
        compiler_params=pltpu.CompilerParams(
            dimension_semantics=("parallel",)
        ),
    )(seed_arr, slab)

    out_flat = out_slab.reshape(-1)
    if padded_n != n:
        out_flat = out_flat[:n]
    return out_flat.reshape(orig_shape)


if __name__ == "__main__":
    key = jax.random.PRNGKey(0)
    x = jax.random.normal(key, (2, 4, 16, 16), dtype=jnp.float32)  # NCHW

    # Default module config: p = 0.0 -> exact identity (no kernel launched).
    y_eval = default_dropout(x, p=0.0, training=False)
    jax.block_until_ready(y_eval)
    assert y_eval.shape == x.shape and y_eval.dtype == x.dtype
    assert bool(jnp.array_equal(y_eval, x)), "p=0 dropout must be identity"

    # Training path with p > 0 exercises the Pallas kernel.
    y_train = default_dropout(x, p=0.25, training=True, seed=42)
    jax.block_until_ready(y_train)
    assert y_train.shape == x.shape and y_train.dtype == x.dtype

    # Every output element is either exactly 0 (dropped) or x/(1-p) (kept).
    expected_kept = x / 0.75
    ok = jnp.isclose(y_train, expected_kept, atol=1e-5, rtol=1e-5) | (y_train == 0)
    assert bool(jnp.all(ok)), "outputs must be 0 or x/(1-p)"

    # Keep fraction should be roughly (1 - p) = 0.75.
    keep_frac = float(jnp.mean((y_train != 0).astype(jnp.float32)))
    assert 0.55 < keep_frac < 0.92, f"keep fraction {keep_frac} far from 0.75"

    # Determinism: same seed -> same mask; different seed -> different mask.
    y_train2 = default_dropout(x, p=0.25, training=True, seed=42)
    assert bool(jnp.array_equal(y_train, y_train2))
    y_train3 = default_dropout(x, p=0.25, training=True, seed=43)
    assert not bool(jnp.array_equal(y_train, y_train3))

    print("KERNEL_OK")
</pallas_src>

<mosaic_0001>
module attributes {stable_mosaic.version = 11 : i64} {
  func.func @_dropout_kernel(%arg0: i32, %arg1: memref<1xi32, #tpu.memory_space<smem>>, %arg2: memref<32x1024xf32, #tpu.memory_space<vmem>>, %arg3: memref<32x1024xf32, #tpu.memory_space<vmem>>) attributes {dimension_semantics = [#tpu.dimension_semantics<parallel>], iteration_bounds = array<i64: 1>, scalar_prefetch = 1 : i64, scratch_operands = 0 : i64, tpu.core_type = #tpu.core_type<tc>, window_params = [{transform_indices = @transform_0, window_bounds = array<i64: 32, 1024>}, {transform_indices = @transform_1, window_bounds = array<i64: 32, 1024>}]} {
    %0 = tpu.iota {dimensions = array<i32: 0>} : vector<32x1024xi32>
    %1 = tpu.iota {dimensions = array<i32: 1>} : vector<32x1024xi32>
    %c32768_i32 = arith.constant 32768 : i32
    %2 = arith.muli %arg0, %c32768_i32 : i32
    %c1024_i32 = arith.constant 1024 : i32
    %3 = vector.broadcast %c1024_i32 : i32 to vector<32x1024xi32>
    %4 = arith.muli %0, %3 : vector<32x1024xi32>
    %5 = vector.broadcast %2 : i32 to vector<32x1024xi32>
    %6 = arith.addi %5, %4 : vector<32x1024xi32>
    %7 = arith.addi %6, %1 : vector<32x1024xi32>
    %c0 = arith.constant 0 : index
    %8 = memref.load %arg1[%c0] : memref<1xi32, #tpu.memory_space<smem>>
    %c-1640531527_i32 = arith.constant -1640531527 : i32
    %9 = arith.muli %8, %c-1640531527_i32 : i32
    %10 = vector.broadcast %9 : i32 to vector<32x1024xi32>
    %11 = arith.xori %7, %10 : vector<32x1024xi32>
    %c16_i32 = arith.constant 16 : i32
    %12 = vector.broadcast %c16_i32 : i32 to vector<32x1024xi32>
    %13 = arith.shrui %11, %12 : vector<32x1024xi32>
    %14 = arith.xori %11, %13 : vector<32x1024xi32>
    %c2146121005_i32 = arith.constant 2146121005 : i32
    %15 = vector.broadcast %c2146121005_i32 : i32 to vector<32x1024xi32>
    %16 = arith.muli %14, %15 : vector<32x1024xi32>
    %c15_i32 = arith.constant 15 : i32
    %17 = vector.broadcast %c15_i32 : i32 to vector<32x1024xi32>
    %18 = arith.shrui %16, %17 : vector<32x1024xi32>
    %19 = arith.xori %16, %18 : vector<32x1024xi32>
    %c-2073254261_i32 = arith.constant -2073254261 : i32
    %20 = vector.broadcast %c-2073254261_i32 : i32 to vector<32x1024xi32>
    %21 = arith.muli %19, %20 : vector<32x1024xi32>
    %c16_i32_0 = arith.constant 16 : i32
    %22 = vector.broadcast %c16_i32_0 : i32 to vector<32x1024xi32>
    %23 = arith.shrui %21, %22 : vector<32x1024xi32>
    %24 = arith.xori %21, %23 : vector<32x1024xi32>
    %c1073741824_i32 = arith.constant 1073741824 : i32
    %25 = vector.broadcast %c1073741824_i32 : i32 to vector<32x1024xi32>
    %26 = arith.cmpi uge, %24, %25 : vector<32x1024xi32>
    %c0_1 = arith.constant 0 : index
    %c0_2 = arith.constant 0 : index
    %27 = vector.load %arg2[%c0_1, %c0_2] : memref<32x1024xf32, #tpu.memory_space<vmem>>, vector<32x1024xf32>
    %cst = arith.constant 1.33333337 : f32
    %28 = vector.broadcast %cst : f32 to vector<32x1024xf32>
    %29 = arith.mulf %27, %28 : vector<32x1024xf32>
    %cst_3 = arith.constant 0.000000e+00 : f32
    %30 = vector.broadcast %cst_3 : f32 to vector<32x1024xf32>
    %31 = arith.select %26, %29, %30 : vector<32x1024xi1>, vector<32x1024xf32>
    %c0_4 = arith.constant 0 : index
    %c0_5 = arith.constant 0 : index
    %32 = vector.load %arg3[%c0_4, %c0_5] : memref<32x1024xf32, #tpu.memory_space<vmem>>, vector<32x1024xf32>
    tpu.vector_store %arg3[%c0_4, %c0_5], %31 {strides = array<i32>} : memref<32x1024xf32, #tpu.memory_space<vmem>>, vector<32x1024xf32>,
    return
  }
  func.func @transform_0(%arg0: i32, %arg1: memref<1xi32, #tpu.memory_space<smem>>) -> (i32, i32) {
    %c0_i32 = arith.constant 0 : i32
    %c0_i32_0 = arith.constant 0 : i32
    return %arg0, %c0_i32 : i32, i32
  }
  func.func @transform_1(%arg0: i32, %arg1: memref<1xi32, #tpu.memory_space<smem>>) -> (i32, i32) {
    %c0_i32 = arith.constant 0 : i32
    %c0_i32_0 = arith.constant 0 : i32
    return %arg0, %c0_i32 : i32, i32
  }
}

</mosaic_0001>

<llo_original>
// kernel: tpu_custom_call.1
$region0: #{tpu_custom_call.1}
  #allocation0 [shape = 'u32[]', space=smem, size = 0x4, offset = 0x4, fixed_abs, tag = 'smem constant byte address 0x4 - core index']
  #allocation1 [shape = 'u32[144,128]{1,0:T(1,128)}', space=vmem, size = 0x12000, scoped, tag = 'internal scratch']
  #allocation2 [shape = 's32[1]{0}', space=sflag, size = 0x4, scoped, tag = 'scoped memory for tpu_custom_call.1']
  #allocation3 [shape = 's32[1]{0:T(128)S(6)}', space=smem, size = 0x200, scoped, tag = 'prefetched SMEM operand 0']
  %s0 = inlined_call_operand.<no memory space> [shape: s32[1], index: 0, kind: input, shape index: {}]
  %s1 = inlined_call_operand.hbm [shape: f32[32,1024], index: 1, kind: input, shape index: {}]
  %s2 = inlined_call_operand.hbm [shape: f32[32,1024], index: 2, kind: output, shape index: {}]
  %s3 = sld [smem:[#allocation0]]
  $region18: #{tpu_custom_call.1} parent=0
    _
  %s5 = ssub.s32 1, %s3
  %s6 = scalar_select 0, %s5, %s3
  %7 = sst [smem:[#allocation3]] %s0
  $region1: #{tpu_custom_call.1} parent=0
    #allocation4 [shape = 'u8[131072]{0}', space=vmem, size = 0x20000, scoped, tag = 'input window, operand 1, single buffered']
    #allocation5 [shape = 's32[1]{0}', space=sflag, size = 0x4, scoped, tag = 'scoped memory for tpu_custom_call.1']
    #allocation6 [shape = 's32[1]{0}', space=sflag, size = 0x4, scoped, tag = 'scoped memory for tpu_custom_call.1']
    #allocation7 [shape = 'u8[131072]{0}', space=vmem, size = 0x20000, scoped, tag = 'output window, operand 0, single buffered']
    %8 = vsyncpa [#allocation5], 0
    %9 = vsyncpa [#allocation6], 0
    // Predicated region
    $region2: #{tpu_custom_call.1} parent=1 // pred_check
      _
    $region3: #{tpu_custom_call.1} parent=1 // pred_check_branch
      %11 = sbr.rel (0) target = $region5
    $region4: #{tpu_custom_call.1} parent=1 // pred_region
      %s13 = ssub.s32 4096, 4096
      %14 = vsyncadd [#allocation5], %s13
      %s15 = sshll.u32 [#allocation4], 4
      %s16 = int_to_ptr.vmem [resolvable:$true] %s15
      %21 = dma.hbm_to_vmem [thread:$0]  %s1, 4096, %s16, [#allocation5], 1024, 1024, 64
    $region5: #{tpu_custom_call.1} parent=1 // pred_fallthru
      _
    // Predicated region
    $region6: #{tpu_custom_call.1} parent=1 // pred_check
      _
    $region7: #{tpu_custom_call.1} parent=1 // pred_check_branch
      %23 = sbr.rel (0) target = $region9
    $region8: #{tpu_custom_call.1} parent=1 // pred_region
      %24 = dma.done [#allocation5], 4096
    $region9: #{tpu_custom_call.1} parent=1 // pred_fallthru
      _
    %v25 = vlaneseq
    %v26 = vshrl.u32 %v25, 7
    %v27 = vadd.s32 %v26, 8
    %v28 = vadd.s32 %v26, 16
    %v29 = vadd.s32 %v26, 24
    %v30 = vlaneseq
    %v31 = vand.u32 %v30, 127
    %v32 = vadd.s32 %v31, 128
    %v33 = vadd.s32 %v31, 256
    %v34 = vadd.s32 %v31, 384
    %v35 = vadd.s32 %v31, 512
    %v36 = vadd.s32 %v31, 640
    %v37 = vadd.s32 %v31, 768
    %v38 = vadd.s32 %v31, 896
    %s39 = smul.u32 0, 32768
    %v40 = vmul.u32 %v26, 1024
    %v41 = vmul.u32 %v27, 1024
    %v42 = vmul.u32 %v28, 1024
    %v43 = vmul.u32 %v29, 1024
    %v44 = vstv %s39
    %v45 = vadd.s32 %v44, %v40
    %v46 = vadd.s32 %v44, %v41
    %v47 = vadd.s32 %v44, %v42
    %v48 = vadd.s32 %v44, %v43
    %v49 = vadd.s32 %v45, %v31
    %v50 = vadd.s32 %v45, %v32
    %v51 = vadd.s32 %v45, %v33
    %v52 = vadd.s32 %v45, %v34
    %v53 = vadd.s32 %v45, %v35
    %v54 = vadd.s32 %v45, %v36
    %v55 = vadd.s32 %v45, %v37
    %v56 = vadd.s32 %v45, %v38
    %v57 = vadd.s32 %v46, %v31
    %v58 = vadd.s32 %v46, %v32
    %v59 = vadd.s32 %v46, %v33
    %v60 = vadd.s32 %v46, %v34
    %v61 = vadd.s32 %v46, %v35
    %v62 = vadd.s32 %v46, %v36
    %v63 = vadd.s32 %v46, %v37
    %v64 = vadd.s32 %v46, %v38
    %v65 = vadd.s32 %v47, %v31
    %v66 = vadd.s32 %v47, %v32
    %v67 = vadd.s32 %v47, %v33
    %v68 = vadd.s32 %v47, %v34
    %v69 = vadd.s32 %v47, %v35
    %v70 = vadd.s32 %v47, %v36
    %v71 = vadd.s32 %v47, %v37
    %v72 = vadd.s32 %v47, %v38
    %v73 = vadd.s32 %v48, %v31
    %v74 = vadd.s32 %v48, %v32
    %v75 = vadd.s32 %v48, %v33
    %v76 = vadd.s32 %v48, %v34
    %v77 = vadd.s32 %v48, %v35
    %v78 = vadd.s32 %v48, %v36
    %v79 = vadd.s32 %v48, %v37
    %v80 = vadd.s32 %v48, %v38
    %s81 = sld [smem:[#allocation3]]
    %s82 = smul.u32 %s81, 2654435769
    %v83 = vstv %s82
    %v84 = vxor.u32 %v49, %v83
    %v85 = vxor.u32 %v50, %v83
    %v86 = vxor.u32 %v51, %v83
    %v87 = vxor.u32 %v52, %v83
    %v88 = vxor.u32 %v53, %v83
    %v89 = vxor.u32 %v54, %v83
    %v90 = vxor.u32 %v55, %v83
    %v91 = vxor.u32 %v56, %v83
    %v92 = vxor.u32 %v57, %v83
    %v93 = vxor.u32 %v58, %v83
    %v94 = vxor.u32 %v59, %v83
    %v95 = vxor.u32 %v60, %v83
    %v96 = vxor.u32 %v61, %v83
    %v97 = vxor.u32 %v62, %v83
    %v98 = vxor.u32 %v63, %v83
    %v99 = vxor.u32 %v64, %v83
    %v100 = vxor.u32 %v65, %v83
    %v101 = vxor.u32 %v66, %v83
    %v102 = vxor.u32 %v67, %v83
    %v103 = vxor.u32 %v68, %v83
    %v104 = vxor.u32 %v69, %v83
    %v105 = vxor.u32 %v70, %v83
    %v106 = vxor.u32 %v71, %v83
    %v107 = vxor.u32 %v72, %v83
    %v108 = vxor.u32 %v73, %v83
    %v109 = vxor.u32 %v74, %v83
    %v110 = vxor.u32 %v75, %v83
    %v111 = vxor.u32 %v76, %v83
    %v112 = vxor.u32 %v77, %v83
    %v113 = vxor.u32 %v78, %v83
    %v114 = vxor.u32 %v79, %v83
    %v115 = vxor.u32 %v80, %v83
    %v116 = vshrl.u32 %v84, 16
    %v117 = vshrl.u32 %v85, 16
    %v118 = vshrl.u32 %v86, 16
    %v119 = vshrl.u32 %v87, 16
    %v120 = vshrl.u32 %v88, 16
    %v121 = vshrl.u32 %v89, 16
    %v122 = vshrl.u32 %v90, 16
    %v123 = vshrl.u32 %v91, 16
    %v124 = vshrl.u32 %v92, 16
    %v125 = vshrl.u32 %v93, 16
    %v126 = vshrl.u32 %v94, 16
    %v127 = vshrl.u32 %v95, 16
    %v128 = vshrl.u32 %v96, 16
    %v129 = vshrl.u32 %v97, 16
    %v130 = vshrl.u32 %v98, 16
    %v131 = vshrl.u32 %v99, 16
    %v132 = vshrl.u32 %v100, 16
    %v133 = vshrl.u32 %v101, 16
    %v134 = vshrl.u32 %v102, 16
    %v135 = vshrl.u32 %v103, 16
    %v136 = vshrl.u32 %v104, 16
    %v137 = vshrl.u32 %v105, 16
    %v138 = vshrl.u32 %v106, 16
    %v139 = vshrl.u32 %v107, 16
    %v140 = vshrl.u32 %v108, 16
    %v141 = vshrl.u32 %v109, 16
    %v142 = vshrl.u32 %v110, 16
    %v143 = vshrl.u32 %v111, 16
    %v144 = vshrl.u32 %v112, 16
    %v145 = vshrl.u32 %v113, 16
    %v146 = vshrl.u32 %v114, 16
    %v147 = vshrl.u32 %v115, 16
    %v148 = vxor.u32 %v84, %v116
    %v149 = vxor.u32 %v85, %v117
    %v150 = vxor.u32 %v86, %v118
    %v151 = vxor.u32 %v87, %v119
    %v152 = vxor.u32 %v88, %v120
    %v153 = vxor.u32 %v89, %v121
    %v154 = vxor.u32 %v90, %v122
    %v155 = vxor.u32 %v91, %v123
    %v156 = vxor.u32 %v92, %v124
    %v157 = vxor.u32 %v93, %v125
    %v158 = vxor.u32 %v94, %v126
    %v159 = vxor.u32 %v95, %v127
    %v160 = vxor.u32 %v96, %v128
    %v161 = vxor.u32 %v97, %v129
    %v162 = vxor.u32 %v98, %v130
    %v163 = vxor.u32 %v99, %v131
    %v164 = vxor.u32 %v100, %v132
    %v165 = vxor.u32 %v101, %v133
    %v166 = vxor.u32 %v102, %v134
    %v167 = vxor.u32 %v103, %v135
    %v168 = vxor.u32 %v104, %v136
    %v169 = vxor.u32 %v105, %v137
    %v170 = vxor.u32 %v106, %v138
    %v171 = vxor.u32 %v107, %v139
    %v172 = vxor.u32 %v108, %v140
    %v173 = vxor.u32 %v109, %v141
    %v174 = vxor.u32 %v110, %v142
    %v175 = vxor.u32 %v111, %v143
    %v176 = vxor.u32 %v112, %v144
    %v177 = vxor.u32 %v113, %v145
    %v178 = vxor.u32 %v114, %v146
    %v179 = vxor.u32 %v115, %v147
    %v180 = vmul.u32 %v148, 2146121005
    %v181 = vmul.u32 %v149, 2146121005
    %v182 = vmul.u32 %v150, 2146121005
    %v183 = vmul.u32 %v151, 2146121005
    %v184 = vmul.u32 %v152, 2146121005
    %v185 = vmul.u32 %v153, 2146121005
    %v186 = vmul.u32 %v154, 2146121005
    %v187 = vmul.u32 %v155, 2146121005
    %v188 = vmul.u32 %v156, 2146121005
    %v189 = vmul.u32 %v157, 2146121005
    %v190 = vmul.u32 %v158, 2146121005
    %v191 = vmul.u32 %v159, 2146121005
    %v192 = vmul.u32 %v160, 2146121005
    %v193 = vmul.u32 %v161, 2146121005
    %v194 = vmul.u32 %v162, 2146121005
    %v195 = vmul.u32 %v163, 2146121005
    %v196 = vmul.u32 %v164, 2146121005
    %v197 = vmul.u32 %v165, 2146121005
    %v198 = vmul.u32 %v166, 2146121005
    %v199 = vmul.u32 %v167, 2146121005
    %v200 = vmul.u32 %v168, 2146121005
    %v201 = vmul.u32 %v169, 2146121005
    %v202 = vmul.u32 %v170, 2146121005
    %v203 = vmul.u32 %v171, 2146121005
    %v204 = vmul.u32 %v172, 2146121005
    %v205 = vmul.u32 %v173, 2146121005
    %v206 = vmul.u32 %v174, 2146121005
    %v207 = vmul.u32 %v175, 2146121005
    %v208 = vmul.u32 %v176, 2146121005
    %v209 = vmul.u32 %v177, 2146121005
    %v210 = vmul.u32 %v178, 2146121005
    %v211 = vmul.u32 %v179, 2146121005
    %v212 = vshrl.u32 %v180, 15
    %v213 = vshrl.u32 %v181, 15
    %v214 = vshrl.u32 %v182, 15
    %v215 = vshrl.u32 %v183, 15
    %v216 = vshrl.u32 %v184, 15
    %v217 = vshrl.u32 %v185, 15
    %v218 = vshrl.u32 %v186, 15
    %v219 = vshrl.u32 %v187, 15
    %v220 = vshrl.u32 %v188, 15
    %v221 = vshrl.u32 %v189, 15
    %v222 = vshrl.u32 %v190, 15
    %v223 = vshrl.u32 %v191, 15
    %v224 = vshrl.u32 %v192, 15
    %v225 = vshrl.u32 %v193, 15
    %v226 = vshrl.u32 %v194, 15
    %v227 = vshrl.u32 %v195, 15
    %v228 = vshrl.u32 %v196, 15
    %v229 = vshrl.u32 %v197, 15
    %v230 = vshrl.u32 %v198, 15
    %v231 = vshrl.u32 %v199, 15
    %v232 = vshrl.u32 %v200, 15
    %v233 = vshrl.u32 %v201, 15
    %v234 = vshrl.u32 %v202, 15
    %v235 = vshrl.u32 %v203, 15
    %v236 = vshrl.u32 %v204, 15
    %v237 = vshrl.u32 %v205, 15
    %v238 = vshrl.u32 %v206, 15
    %v239 = vshrl.u32 %v207, 15
    %v240 = vshrl.u32 %v208, 15
    %v241 = vshrl.u32 %v209, 15
    %v242 = vshrl.u32 %v210, 15
    %v243 = vshrl.u32 %v211, 15
    %v244 = vxor.u32 %v180, %v212
    %v245 = vxor.u32 %v181, %v213
    %v246 = vxor.u32 %v182, %v214
    %v247 = vxor.u32 %v183, %v215
    %v248 = vxor.u32 %v184, %v216
    %v249 = vxor.u32 %v185, %v217
    %v250 = vxor.u32 %v186, %v218
    %v251 = vxor.u32 %v187, %v219
    %v252 = vxor.u32 %v188, %v220
    %v253 = vxor.u32 %v189, %v221
    %v254 = vxor.u32 %v190, %v222
    %v255 = vxor.u32 %v191, %v223
    %v256 = vxor.u32 %v192, %v224
    %v257 = vxor.u32 %v193, %v225
    %v258 = vxor.u32 %v194, %v226
    %v259 = vxor.u32 %v195, %v227
    %v260 = vxor.u32 %v196, %v228
    %v261 = vxor.u32 %v197, %v229
    %v262 = vxor.u32 %v198, %v230
    %v263 = vxor.u32 %v199, %v231
    %v264 = vxor.u32 %v200, %v232
    %v265 = vxor.u32 %v201, %v233
    %v266 = vxor.u32 %v202, %v234
    %v267 = vxor.u32 %v203, %v235
    %v268 = vxor.u32 %v204, %v236
    %v269 = vxor.u32 %v205, %v237
    %v270 = vxor.u32 %v206, %v238
    %v271 = vxor.u32 %v207, %v239
    %v272 = vxor.u32 %v208, %v240
    %v273 = vxor.u32 %v209, %v241
    %v274 = vxor.u32 %v210, %v242
    %v275 = vxor.u32 %v211, %v243
    %v276 = vmul.u32 %v244, 2221713035
    %v277 = vmul.u32 %v245, 2221713035
    %v278 = vmul.u32 %v246, 2221713035
    %v279 = vmul.u32 %v247, 2221713035
    %v280 = vmul.u32 %v248, 2221713035
    %v281 = vmul.u32 %v249, 2221713035
    %v282 = vmul.u32 %v250, 2221713035
    %v283 = vmul.u32 %v251, 2221713035
    %v284 = vmul.u32 %v252, 2221713035
    %v285 = vmul.u32 %v253, 2221713035
    %v286 = vmul.u32 %v254, 2221713035
    %v287 = vmul.u32 %v255, 2221713035
    %v288 = vmul.u32 %v256, 2221713035
    %v289 = vmul.u32 %v257, 2221713035
    %v290 = vmul.u32 %v258, 2221713035
    %v291 = vmul.u32 %v259, 2221713035
    %v292 = vmul.u32 %v260, 2221713035
    %v293 = vmul.u32 %v261, 2221713035
    %v294 = vmul.u32 %v262, 2221713035
    %v295 = vmul.u32 %v263, 2221713035
    %v296 = vmul.u32 %v264, 2221713035
    %v297 = vmul.u32 %v265, 2221713035
    %v298 = vmul.u32 %v266, 2221713035
    %v299 = vmul.u32 %v267, 2221713035
    %v300 = vmul.u32 %v268, 2221713035
    %v301 = vmul.u32 %v269, 2221713035
    %v302 = vmul.u32 %v270, 2221713035
    %v303 = vmul.u32 %v271, 2221713035
    %v304 = vmul.u32 %v272, 2221713035
    %v305 = vmul.u32 %v273, 2221713035
    %v306 = vmul.u32 %v274, 2221713035
    %v307 = vmul.u32 %v275, 2221713035
    %v308 = vshrl.u32 %v276, 16
    %v309 = vshrl.u32 %v277, 16
    %v310 = vshrl.u32 %v278, 16
    %v311 = vshrl.u32 %v279, 16
    %v312 = vshrl.u32 %v280, 16
    %v313 = vshrl.u32 %v281, 16
    %v314 = vshrl.u32 %v282, 16
    %v315 = vshrl.u32 %v283, 16
    %v316 = vshrl.u32 %v284, 16
    %v317 = vshrl.u32 %v285, 16
    %v318 = vshrl.u32 %v286, 16
    %v319 = vshrl.u32 %v287, 16
    %v320 = vshrl.u32 %v288, 16
    %v321 = vshrl.u32 %v289, 16
    %v322 = vshrl.u32 %v290, 16
    %v323 = vshrl.u32 %v291, 16
    %v324 = vshrl.u32 %v292, 16
    %v325 = vshrl.u32 %v293, 16
    %v326 = vshrl.u32 %v294, 16
    %v327 = vshrl.u32 %v295, 16
    %v328 = vshrl.u32 %v296, 16
    %v329 = vshrl.u32 %v297, 16
    %v330 = vshrl.u32 %v298, 16
    %v331 = vshrl.u32 %v299, 16
    %v332 = vshrl.u32 %v300, 16
    %v333 = vshrl.u32 %v301, 16
    %v334 = vshrl.u32 %v302, 16
    %v335 = vshrl.u32 %v303, 16
    %v336 = vshrl.u32 %v304, 16
    %v337 = vshrl.u32 %v305, 16
    %v338 = vshrl.u32 %v306, 16
    %v339 = vshrl.u32 %v307, 16
    %v340 = vxor.u32 %v276, %v308
    %v341 = vxor.u32 %v277, %v309
    %v342 = vxor.u32 %v278, %v310
    %v343 = vxor.u32 %v279, %v311
    %v344 = vxor.u32 %v280, %v312
    %v345 = vxor.u32 %v281, %v313
    %v346 = vxor.u32 %v282, %v314
    %v347 = vxor.u32 %v283, %v315
    %v348 = vxor.u32 %v284, %v316
    %v349 = vxor.u32 %v285, %v317
    %v350 = vxor.u32 %v286, %v318
    %v351 = vxor.u32 %v287, %v319
    %v352 = vxor.u32 %v288, %v320
    %v353 = vxor.u32 %v289, %v321
    %v354 = vxor.u32 %v290, %v322
    %v355 = vxor.u32 %v291, %v323
    %v356 = vxor.u32 %v292, %v324
    %v357 = vxor.u32 %v293, %v325
    %v358 = vxor.u32 %v294, %v326
    %v359 = vxor.u32 %v295, %v327
    %v360 = vxor.u32 %v296, %v328
    %v361 = vxor.u32 %v297, %v329
    %v362 = vxor.u32 %v298, %v330
    %v363 = vxor.u32 %v299, %v331
    %v364 = vxor.u32 %v300, %v332
    %v365 = vxor.u32 %v301, %v333
    %v366 = vxor.u32 %v302, %v334
    %v367 = vxor.u32 %v303, %v335
    %v368 = vxor.u32 %v304, %v336
    %v369 = vxor.u32 %v305, %v337
    %v370 = vxor.u32 %v306, %v338
    %v371 = vxor.u32 %v307, %v339
    %vm372 = vcmp.ge.u32.totalorder %v340, 1073741824
    %vm373 = vcmp.ge.u32.totalorder %v341, 1073741824
    %vm374 = vcmp.ge.u32.totalorder %v342, 1073741824
    %vm375 = vcmp.ge.u32.totalorder %v343, 1073741824
    %vm376 = vcmp.ge.u32.totalorder %v344, 1073741824
    %vm377 = vcmp.ge.u32.totalorder %v345, 1073741824
    %vm378 = vcmp.ge.u32.totalorder %v346, 1073741824
    %vm379 = vcmp.ge.u32.totalorder %v347, 1073741824
    %vm380 = vcmp.ge.u32.totalorder %v348, 1073741824
    %vm381 = vcmp.ge.u32.totalorder %v349, 1073741824
    %vm382 = vcmp.ge.u32.totalorder %v350, 1073741824
    %vm383 = vcmp.ge.u32.totalorder %v351, 1073741824
    %vm384 = vcmp.ge.u32.totalorder %v352, 1073741824
    %vm385 = vcmp.ge.u32.totalorder %v353, 1073741824
    %vm386 = vcmp.ge.u32.totalorder %v354, 1073741824
    %vm387 = vcmp.ge.u32.totalorder %v355, 1073741824
    %vm388 = vcmp.ge.u32.totalorder %v356, 1073741824
    %vm389 = vcmp.ge.u32.totalorder %v357, 1073741824
    %vm390 = vcmp.ge.u32.totalorder %v358, 1073741824
    %vm391 = vcmp.ge.u32.totalorder %v359, 1073741824
    %vm392 = vcmp.ge.u32.totalorder %v360, 1073741824
    %vm393 = vcmp.ge.u32.totalorder %v361, 1073741824
    %vm394 = vcmp.ge.u32.totalorder %v362, 1073741824
    %vm395 = vcmp.ge.u32.totalorder %v363, 1073741824
    %vm396 = vcmp.ge.u32.totalorder %v364, 1073741824
    %vm397 = vcmp.ge.u32.totalorder %v365, 1073741824
    %vm398 = vcmp.ge.u32.totalorder %v366, 1073741824
    %vm399 = vcmp.ge.u32.totalorder %v367, 1073741824
    %vm400 = vcmp.ge.u32.totalorder %v368, 1073741824
    %vm401 = vcmp.ge.u32.totalorder %v369, 1073741824
    %vm402 = vcmp.ge.u32.totalorder %v370, 1073741824
    %vm403 = vcmp.ge.u32.totalorder %v371, 1073741824
    %v404 = vld [vmem:[#allocation4] sm:$0xff]
    %v405 = vld [vmem:[#allocation4 + $0x8] sm:$0xff]
    %v406 = vld [vmem:[#allocation4 + $0x10] sm:$0xff]
    %v407 = vld [vmem:[#allocation4 + $0x18] sm:$0xff]
    %v408 = vld [vmem:[#allocation4 + $0x20] sm:$0xff]
    %v409 = vld [vmem:[#allocation4 + $0x28] sm:$0xff]
    %v410 = vld [vmem:[#allocation4 + $0x30] sm:$0xff]
    %v411 = vld [vmem:[#allocation4 + $0x38] sm:$0xff]
    %v412 = vld [vmem:[#allocation4 + $0x40] sm:$0xff]
    %v413 = vld [vmem:[#allocation4 + $0x48] sm:$0xff]
    %v414 = vld [vmem:[#allocation4 + $0x50] sm:$0xff]
    %v415 = vld [vmem:[#allocation4 + $0x58] sm:$0xff]
    %v416 = vld [vmem:[#allocation4 + $0x60] sm:$0xff]
    %v417 = vld [vmem:[#allocation4 + $0x68] sm:$0xff]
    %v418 = vld [vmem:[#allocation4 + $0x70] sm:$0xff]
    %v419 = vld [vmem:[#allocation4 + $0x78] sm:$0xff]
    %v420 = vld [vmem:[#allocation4 + $0x80] sm:$0xff]
    %v421 = vld [vmem:[#allocation4 + $0x88] sm:$0xff]
    %v422 = vld [vmem:[#allocation4 + $0x90] sm:$0xff]
    %v423 = vld [vmem:[#allocation4 + $0x98] sm:$0xff]
    %v424 = vld [vmem:[#allocation4 + $0xa0] sm:$0xff]
    %v425 = vld [vmem:[#allocation4 + $0xa8] sm:$0xff]
    %v426 = vld [vmem:[#allocation4 + $0xb0] sm:$0xff]
    %v427 = vld [vmem:[#allocation4 + $0xb8] sm:$0xff]
    %v428 = vld [vmem:[#allocation4 + $0xc0] sm:$0xff]
    %v429 = vld [vmem:[#allocation4 + $0xc8] sm:$0xff]
    %v430 = vld [vmem:[#allocation4 + $0xd0] sm:$0xff]
    %v431 = vld [vmem:[#allocation4 + $0xd8] sm:$0xff]
    %v432 = vld [vmem:[#allocation4 + $0xe0] sm:$0xff]
    %v433 = vld [vmem:[#allocation4 + $0xe8] sm:$0xff]
    %v434 = vld [vmem:[#allocation4 + $0xf0] sm:$0xff]
    %v435 = vld [vmem:[#allocation4 + $0xf8] sm:$0xff]
    %v436 = vmul.f32 %v404, 1.3333334
    %v437 = vmul.f32 %v405, 1.3333334
    %v438 = vmul.f32 %v406, 1.3333334
    %v439 = vmul.f32 %v407, 1.3333334
    %v440 = vmul.f32 %v408, 1.3333334
    %v441 = vmul.f32 %v409, 1.3333334
    %v442 = vmul.f32 %v410, 1.3333334
    %v443 = vmul.f32 %v411, 1.3333334
    %v444 = vmul.f32 %v412, 1.3333334
    %v445 = vmul.f32 %v413, 1.3333334
    %v446 = vmul.f32 %v414, 1.3333334
    %v447 = vmul.f32 %v415, 1.3333334
    %v448 = vmul.f32 %v416, 1.3333334
    %v449 = vmul.f32 %v417, 1.3333334
    %v450 = vmul.f32 %v418, 1.3333334
    %v451 = vmul.f32 %v419, 1.3333334
    %v452 = vmul.f32 %v420, 1.3333334
    %v453 = vmul.f32 %v421, 1.3333334
    %v454 = vmul.f32 %v422, 1.3333334
    %v455 = vmul.f32 %v423, 1.3333334
    %v456 = vmul.f32 %v424, 1.3333334
    %v457 = vmul.f32 %v425, 1.3333334
    %v458 = vmul.f32 %v426, 1.3333334
    %v459 = vmul.f32 %v427, 1.3333334
    %v460 = vmul.f32 %v428, 1.3333334
    %v461 = vmul.f32 %v429, 1.3333334
    %v462 = vmul.f32 %v430, 1.3333334
    %v463 = vmul.f32 %v431, 1.3333334
    %v464 = vmul.f32 %v432, 1.3333334
    %v465 = vmul.f32 %v433, 1.3333334
    %v466 = vmul.f32 %v434, 1.3333334
    %v467 = vmul.f32 %v435, 1.3333334
    %v468 = vsel %vm372, %v436, 0.0
    %v469 = vsel %vm373, %v437, 0.0
    %v470 = vsel %vm374, %v438, 0.0
    %v471 = vsel %vm375, %v439, 0.0
    %v472 = vsel %vm376, %v440, 0.0
    %v473 = vsel %vm377, %v441, 0.0
    %v474 = vsel %vm378, %v442, 0.0
    %v475 = vsel %vm379, %v443, 0.0
    %v476 = vsel %vm380, %v444, 0.0
    %v477 = vsel %vm381, %v445, 0.0
    %v478 = vsel %vm382, %v446, 0.0
    %v479 = vsel %vm383, %v447, 0.0
    %v480 = vsel %vm384, %v448, 0.0
    %v481 = vsel %vm385, %v449, 0.0
    %v482 = vsel %vm386, %v450, 0.0
    %v483 = vsel %vm387, %v451, 0.0
    %v484 = vsel %vm388, %v452, 0.0
    %v485 = vsel %vm389, %v453, 0.0
    %v486 = vsel %vm390, %v454, 0.0
    %v487 = vsel %vm391, %v455, 0.0
    %v488 = vsel %vm392, %v456, 0.0
    %v489 = vsel %vm393, %v457, 0.0
    %v490 = vsel %vm394, %v458, 0.0
    %v491 = vsel %vm395, %v459, 0.0
    %v492 = vsel %vm396, %v460, 0.0
    %v493 = vsel %vm397, %v461, 0.0
    %v494 = vsel %vm398, %v462, 0.0
    %v495 = vsel %vm399, %v463, 0.0
    %v496 = vsel %vm400, %v464, 0.0
    %v497 = vsel %vm401, %v465, 0.0
    %v498 = vsel %vm402, %v466, 0.0
    %v499 = vsel %vm403, %v467, 0.0
    %500 = vst [vmem:[#allocation7] sm:$0xff] %v468
    %501 = vst [vmem:[#allocation7 + $0x8] sm:$0xff] %v469
    %502 = vst [vmem:[#allocation7 + $0x10] sm:$0xff] %v470
    %503 = vst [vmem:[#allocation7 + $0x18] sm:$0xff] %v471
    %504 = vst [vmem:[#allocation7 + $0x20] sm:$0xff] %v472
    %505 = vst [vmem:[#allocation7 + $0x28] sm:$0xff] %v473
    %506 = vst [vmem:[#allocation7 + $0x30] sm:$0xff] %v474
    %507 = vst [vmem:[#allocation7 + $0x38] sm:$0xff] %v475
    %508 = vst [vmem:[#allocation7 + $0x40] sm:$0xff] %v476
    %509 = vst [vmem:[#allocation7 + $0x48] sm:$0xff] %v477
    %510 = vst [vmem:[#allocation7 + $0x50] sm:$0xff] %v478
    %511 = vst [vmem:[#allocation7 + $0x58] sm:$0xff] %v479
    %512 = vst [vmem:[#allocation7 + $0x60] sm:$0xff] %v480
    %513 = vst [vmem:[#allocation7 + $0x68] sm:$0xff] %v481
    %514 = vst [vmem:[#allocation7 + $0x70] sm:$0xff] %v482
    %515 = vst [vmem:[#allocation7 + $0x78] sm:$0xff] %v483
    %516 = vst [vmem:[#allocation7 + $0x80] sm:$0xff] %v484
    %517 = vst [vmem:[#allocation7 + $0x88] sm:$0xff] %v485
    %518 = vst [vmem:[#allocation7 + $0x90] sm:$0xff] %v486
    %519 = vst [vmem:[#allocation7 + $0x98] sm:$0xff] %v487
    %520 = vst [vmem:[#allocation7 + $0xa0] sm:$0xff] %v488
    %521 = vst [vmem:[#allocation7 + $0xa8] sm:$0xff] %v489
    %522 = vst [vmem:[#allocation7 + $0xb0] sm:$0xff] %v490
    %523 = vst [vmem:[#allocation7 + $0xb8] sm:$0xff] %v491
    %524 = vst [vmem:[#allocation7 + $0xc0] sm:$0xff] %v492
    %525 = vst [vmem:[#allocation7 + $0xc8] sm:$0xff] %v493
    %526 = vst [vmem:[#allocation7 + $0xd0] sm:$0xff] %v494
    %527 = vst [vmem:[#allocation7 + $0xd8] sm:$0xff] %v495
    %528 = vst [vmem:[#allocation7 + $0xe0] sm:$0xff] %v496
    %529 = vst [vmem:[#allocation7 + $0xe8] sm:$0xff] %v497
    %530 = vst [vmem:[#allocation7 + $0xf0] sm:$0xff] %v498
    %531 = vst [vmem:[#allocation7 + $0xf8] sm:$0xff] %v499
    // Predicated region
    $region10: #{tpu_custom_call.1} parent=1 // pred_check
      _
    $region11: #{tpu_custom_call.1} parent=1 // pred_check_branch
      %533 = sbr.rel (0) target = $region13
    $region12: #{tpu_custom_call.1} parent=1 // pred_region
      %s535 = ssub.s32 4096, 4096
      %536 = vsyncadd [#allocation6], %s535
      %s537 = sshll.u32 [#allocation7], 4
      %s538 = int_to_ptr.vmem [resolvable:$true] %s537
      %543 = dma.vmem_to_hbm [thread:$0]  %s538, 4096, %s2, [#allocation6], 1024, 1024, 64
    $region13: #{tpu_custom_call.1} parent=1 // pred_fallthru
      _
    // Predicated region
    $region14: #{tpu_custom_call.1} parent=1 // pred_check
      _
    $region15: #{tpu_custom_call.1} parent=1 // pred_check_branch
      %545 = sbr.rel (0) target = $region17
    $region16: #{tpu_custom_call.1} parent=1 // pred_region
      %546 = dma.done [#allocation6], 4096
    $region17: #{tpu_custom_call.1} parent=1 // pred_fallthru
      _
    %547 = vsyncpa [#allocation5], 1
    %548 = vsyncpa [#allocation6], 1

</llo_original>
